<compile_context>
chip_gen: v5e
topology: v5e:2x2
jax: 0.10.0
libtpu: 0.0.40
codegen_flags: <defaults>
</compile_context>

<pallas_src>
import functools

import jax
import jax.numpy as jnp
from jax import lax
from jax.experimental import pallas as pl
from jax.experimental.pallas import tpu as pltpu


# ---------------------------------------------------------------------------
# Kernels
# ---------------------------------------------------------------------------
def _linear_kernel_fullk(x_ref, w_ref, b_ref, o_ref):
    """Full-K contraction: one MXU dot per output tile, no accumulator scratch.

    x_ref: (tm, K)   activations
    w_ref: (tn, K)   weight tile in PyTorch (out, in) layout
    b_ref: (1, tn)   bias tile
    o_ref: (tm, tn)  output tile
    """
    acc = lax.dot_general(
        x_ref[...],
        w_ref[...],
        dimension_numbers=(((1,), (1,)), ((), ())),  # contract the "in" axes
        preferred_element_type=jnp.float32,
    )
    # TODO(synk): confirm in the Mosaic bundle dump that contracting on the
    # weight's last (lane) dim does not emit per-tile XLU transposes; if it
    # does, pre-transpose the weight once to (K, N) outside the kernel.
    o_ref[...] = (acc + b_ref[...].astype(jnp.float32)).astype(o_ref.dtype)


def _linear_kernel_ksplit(x_ref, w_ref, b_ref, o_ref, acc_ref):
    """K-split contraction with f32 accumulator scratch (fallback only)."""
    k = pl.program_id(2)

    @pl.when(k == 0)
    def _():
        acc_ref[...] = jnp.zeros_like(acc_ref)

    acc_ref[...] += lax.dot_general(
        x_ref[...],
        w_ref[...],
        dimension_numbers=(((1,), (1,)), ((), ())),
        preferred_element_type=jnp.float32,
    )

    @pl.when(k == pl.num_programs(2) - 1)
    def _():
        o_ref[...] = (acc_ref[...] + b_ref[...].astype(jnp.float32)).astype(
            o_ref.dtype
        )


# ---------------------------------------------------------------------------
# VMEM / tiling heuristics
# ---------------------------------------------------------------------------
@functools.lru_cache(maxsize=1)
def _vmem_capacity_bytes():
    """Physical VMEM of the local TPU generation (conservative fallback)."""
    try:
        cap = int(getattr(pltpu.get_tpu_info(), "vmem_capacity_bytes", 0))
        if cap > 0:
            return cap
    except Exception:
        pass
    return 64 * (1 << 20)  # v7x per-TC size: safe lower bound on all gens


def _round_up(x, m):
    return ((x + m - 1) // m) * m


def _vmem_estimate(tm, tn, tk, in_itemsize, out_itemsize, with_acc, w_bufs=2):
    nbytes = 2 * (tm * tk + tn) * in_itemsize   # x tile + bias (double-buffered)
    nbytes += w_bufs * tn * tk * in_itemsize    # weight tile buffers
    nbytes += 2 * tm * tn * out_itemsize        # output tile (double-buffered)
    if with_acc:
        nbytes += tm * tn * 4                   # f32 accumulator scratch
    return nbytes


def _pick_tiles(M_pad, N, K, in_itemsize, out_itemsize, budget, small_m):
    """Pick (tm, tn, tk, split_k).  Prefer the full-K single-dot path."""
    if small_m:
        tm_cands = [M_pad]
    else:
        tm_cands = [c for c in (512, 256, 128) if c <= M_pad and M_pad % c == 0]
        if not tm_cands:
            tm_cands = [128]

    tn_cands = []
    for c in (N, 1024, 512, 384, 256, 128):
        if c <= N and N % c == 0 and c not in tn_cands:
            tn_cands.append(c)
    if not tn_cands:
        tn_cands = [N]

    # Full-K: largest tm*tn that fits, tie-break on larger (lane-dense) tn.
    best = None
    for tm in tm_cands:
        for tn in tn_cands:
            if _vmem_estimate(tm, tn, K, in_itemsize, out_itemsize, False) <= budget:
                key = (tm * tn, tn)
                if best is None or key > best[0]:
                    best = (key, tm, tn)
    if best is not None:
        return best[1], best[2], K, False

    # K-split fallback: smallest tiles, largest tk that fits.
    tm, tn = tm_cands[-1], tn_cands[-1]
    for tk in (2048, 1024, 512, 256, 128):
        if tk <= K and K % tk == 0 and _vmem_estimate(
            tm, tn, tk, in_itemsize, out_itemsize, True
        ) <= budget:
            return tm, tn, tk, True
    return tm, tn, 128, True


# ---------------------------------------------------------------------------
# Wrapper
# ---------------------------------------------------------------------------
@functools.partial(
    jax.jit, static_argnames=("compute_dtype", "max_tile_vmem_bytes")
)
def dist_classifier_forward(x, weight, bias, *, compute_dtype=None,
                            max_tile_vmem_bytes=None):
    """y = x @ weight.T + bias, matching nn.Linear semantics.

    x:       (B, feat_dim)
    weight:  (feat_dim, feat_dim)  -- PyTorch (out, in) layout, used as-is
    bias:    (feat_dim,)
    compute_dtype: optional MXU input dtype (e.g. jnp.bfloat16); accumulation
        stays f32 and the output keeps x.dtype.  For best perf store the
        static classifier weight in that dtype once so the in-call cast is a
        no-op (halves weight HBM traffic).
    max_tile_vmem_bytes: optional cap on the tile-fit budget (testing knob).
    """
    M, K = x.shape
    N, K_w = weight.shape
    assert K_w == K, "weight must be (out_features, in_features)"
    assert bias.shape == (N,)
    assert N % 128 == 0 and K % 128 == 0, (
        "feat_dim must be a multiple of 128 for this kernel"
    )

    out_dtype = x.dtype
    if compute_dtype is not None:
        if x.dtype != compute_dtype:
            x = x.astype(compute_dtype)
        if weight.dtype != compute_dtype:
            # NOTE: store the weight in `compute_dtype` outside this call to
            # avoid a full extra HBM read+write of the weight every forward.
            weight = weight.astype(compute_dtype)

    in_itemsize = jnp.dtype(x.dtype).itemsize
    out_itemsize = jnp.dtype(out_dtype).itemsize
    sublane_mult = max(8, 32 // in_itemsize)  # 8 (f32) / 16 (bf16) / 32 (int8)

    # Generation-aware VMEM sizing.
    vmem_cap = _vmem_capacity_bytes()
    budget = int(0.70 * vmem_cap)
    if max_tile_vmem_bytes is not None:
        budget = min(budget, int(max_tile_vmem_bytes))
    vmem_limit = min(int(0.85 * vmem_cap), 128 * (1 << 20))

    # Batch tiling: small batches keep x fully resident (weight-streaming).
    small_m = M < 128
    M_pad = _round_up(M, sublane_mult) if small_m else _round_up(M, 128)
    if M_pad != M:
        x = jnp.pad(x, ((0, M_pad - M), (0, 0)))

    tm, tn, tk, split_k = _pick_tiles(
        M_pad, N, K, in_itemsize, out_itemsize, budget, small_m
    )

    # Deeper weight DMA queue on the small-batch weight-streaming path when
    # the third buffer fits and there are >= 2 weight tiles to stream.
    w_pipeline = None
    if (not split_k) and small_m and (N // tn) >= 2 and _vmem_estimate(
        tm, tn, tk, in_itemsize, out_itemsize, False, w_bufs=3
    ) <= budget:
        w_pipeline = pl.Buffered(3)

    def w_spec(shape, imap):
        if w_pipeline is None:
            return pl.BlockSpec(shape, imap)
        return pl.BlockSpec(shape, imap, pipeline_mode=w_pipeline)

    b2d = bias.reshape(1, N)  # (1, N) so bias tiles along lanes

    # Grid ordering: keep the LARGER operand's block invariant over the inner
    # grid axis so it is DMA'd from HBM exactly once.
    weight_major = (N * K) >= (M_pad * K)

    cost = pl.CostEstimate(
        flops=2 * M_pad * N * K,
        transcendentals=0,
        bytes_accessed=int(
            M_pad * K * in_itemsize
            + N * K * in_itemsize
            + N * bias.dtype.itemsize
            + M_pad * N * out_itemsize
        ),
    )
    cparams = pltpu.CompilerParams(
        dimension_semantics=(
            ("parallel", "parallel") if not split_k
            else ("parallel", "parallel", "arbitrary")
        ),
        vmem_limit_bytes=vmem_limit,
    )

    if not split_k:
        if weight_major:
            grid = (N // tn, M_pad // tm)
            in_specs = [
                pl.BlockSpec((tm, K), lambda j, i: (i, 0)),   # x tile (full K)
                w_spec((tn, K), lambda j, i: (j, 0)),          # W tile (out, in)
                pl.BlockSpec((1, tn), lambda j, i: (0, j)),    # bias tile
            ]
            out_specs = pl.BlockSpec((tm, tn), lambda j, i: (i, j))
        else:
            grid = (M_pad // tm, N // tn)
            in_specs = [
                pl.BlockSpec((tm, K), lambda i, j: (i, 0)),
                w_spec((tn, K), lambda i, j: (j, 0)),
                pl.BlockSpec((1, tn), lambda i, j: (0, j)),
            ]
            out_specs = pl.BlockSpec((tm, tn), lambda i, j: (i, j))

        out = pl.pallas_call(
            _linear_kernel_fullk,
            out_shape=jax.ShapeDtypeStruct((M_pad, N), out_dtype),
            grid_spec=pltpu.PrefetchScalarGridSpec(
                num_scalar_prefetch=0,
                grid=grid,
                in_specs=in_specs,
                out_specs=out_specs,
            ),
            compiler_params=cparams,
            cost_estimate=cost,
        )(x, weight, b2d)
    else:
        if weight_major:
            grid = (N // tn, M_pad // tm, K // tk)
            in_specs = [
                pl.BlockSpec((tm, tk), lambda j, i, k: (i, k)),
                pl.BlockSpec((tn, tk), lambda j, i, k: (j, k)),
                pl.BlockSpec((1, tn), lambda j, i, k: (0, j)),
            ]
            out_specs = pl.BlockSpec((tm, tn), lambda j, i, k: (i, j))
        else:
            grid = (M_pad // tm, N // tn, K // tk)
            in_specs = [
                pl.BlockSpec((tm, tk), lambda i, j, k: (i, k)),
                pl.BlockSpec((tn, tk), lambda i, j, k: (j, k)),
                pl.BlockSpec((1, tn), lambda i, j, k: (0, j)),
            ]
            out_specs = pl.BlockSpec((tm, tn), lambda i, j, k: (i, j))

        out = pl.pallas_call(
            _linear_kernel_ksplit,
            out_shape=jax.ShapeDtypeStruct((M_pad, N), out_dtype),
            grid_spec=pltpu.PrefetchScalarGridSpec(
                num_scalar_prefetch=0,
                grid=grid,
                in_specs=in_specs,
                out_specs=out_specs,
                scratch_shapes=[pltpu.VMEM((tm, tn), jnp.float32)],
            ),
            compiler_params=cparams,
            cost_estimate=cost,
        )(x, weight, b2d)

    return out[:M] if M_pad != M else out


# ---------------------------------------------------------------------------
# Self-test
# ---------------------------------------------------------------------------
if __name__ == "__main__":
    feat_dim = 256  # small but a multiple of 128, consistent with the module

    key = jax.random.PRNGKey(0)
    kx, kw, kb, kx2, kx3 = jax.random.split(key, 5)

    weight = jax.random.normal(kw, (feat_dim, feat_dim), dtype=jnp.float32) * (
        1.0 / jnp.sqrt(feat_dim)
    )
    bias = jax.random.normal(kb, (feat_dim,), dtype=jnp.float32) * 0.01

    def ref(x_, w_=weight, b_=bias):
        return x_ @ w_.T + b_

    # 1) Small batch (weight-streaming, weight-major, full-K).
    x = jax.random.normal(kx, (8, feat_dim), dtype=jnp.float32)
    y = jax.block_until_ready(dist_classifier_forward(x, weight, bias))
    assert y.shape == (8, feat_dim)
    assert jnp.allclose(y, ref(x), atol=1e-4, rtol=1e-4), "f32 small-batch mismatch"

    # 2) Non-tile-aligned batch (padding path).
    x2 = jax.random.normal(kx2, (5, feat_dim), dtype=jnp.float32)
    y2 = jax.block_until_ready(dist_classifier_forward(x2, weight, bias))
    assert jnp.allclose(y2, ref(x2), atol=1e-4, rtol=1e-4), "padded-batch mismatch"

    # 3) Large batch (x-major grid ordering, full-K).
    x3 = jax.random.normal(kx3, (512, feat_dim), dtype=jnp.float32)
    y3 = jax.block_until_ready(dist_classifier_forward(x3, weight, bias))
    assert jnp.allclose(y3, ref(x3), atol=1e-4, rtol=1e-4), "large-batch mismatch"

    # 4) bf16 compute path (weight pre-cast once, f32 accumulation).
    weight_bf16 = weight.astype(jnp.bfloat16)
    y4 = jax.block_until_ready(
        dist_classifier_forward(x, weight_bf16, bias, compute_dtype=jnp.bfloat16)
    )
    assert jnp.allclose(y4, ref(x), atol=5e-2, rtol=5e-2), "bf16 path mismatch"

    # 5) Forced K-split fallback (tiny tile budget) to validate the acc kernel.
    y5 = jax.block_until_ready(
        dist_classifier_forward(x, weight, bias, max_tile_vmem_bytes=200_000)
    )
    assert jnp.allclose(y5, ref(x), atol=1e-4, rtol=1e-4), "k-split mismatch"

    # 6) Forced multi-tile weight streaming with Buffered(3) weight pipeline.
    y6 = jax.block_until_ready(
        dist_classifier_forward(x, weight, bias, max_tile_vmem_bytes=450_000)
    )
    assert jnp.allclose(y6, ref(x), atol=1e-4, rtol=1e-4), "buffered-weight mismatch"

    print("KERNEL_OK")
</pallas_src>

<mosaic_0001>
module attributes {stable_mosaic.version = 11 : i64} {
  func.func @_linear_kernel_fullk(%arg0: i32, %arg1: i32, %arg2: memref<8x256xf32, #tpu.memory_space<vmem>>, %arg3: memref<256x256xf32, #tpu.memory_space<vmem>>, %arg4: memref<1x256xf32, #tpu.memory_space<vmem>>, %arg5: memref<8x256xf32, #tpu.memory_space<vmem>>) attributes {dimension_semantics = [#tpu.dimension_semantics<parallel>, #tpu.dimension_semantics<parallel>], iteration_bounds = array<i64: 1, 1>, scalar_prefetch = 0 : i64, scratch_operands = 0 : i64, tpu.core_type = #tpu.core_type<tc>, window_params = [{transform_indices = @transform_0, window_bounds = array<i64: 8, 256>}, {transform_indices = @transform_1, window_bounds = array<i64: 256, 256>}, {transform_indices = @transform_2, window_bounds = array<i64: 1, 256>}, {transform_indices = @transform_3, window_bounds = array<i64: 8, 256>}]} {
    %c0 = arith.constant 0 : index
    %c0_0 = arith.constant 0 : index
    %0 = vector.load %arg2[%c0, %c0_0] : memref<8x256xf32, #tpu.memory_space<vmem>>, vector<8x256xf32>
    %c0_1 = arith.constant 0 : index
    %c0_2 = arith.constant 0 : index
    %1 = vector.load %arg3[%c0_1, %c0_2] : memref<256x256xf32, #tpu.memory_space<vmem>>, vector<256x256xf32>
    %cst = arith.constant dense<0.000000e+00> : vector<8x256xf32>
    %2 = tpu.matmul %0, %1, %cst {dimension_numbers = #tpu.dot_dimension_numbers<[1], [1], [0], [0], [0, 0, 1, 0], [], []>} : vector<8x256xf32>, vector<256x256xf32>, vector<8x256xf32> -> vector<8x256xf32>
    %c0_3 = arith.constant 0 : index
    %c0_4 = arith.constant 0 : index
    %3 = vector.load %arg4[%c0_3, %c0_4] : memref<1x256xf32, #tpu.memory_space<vmem>>, vector<1x256xf32>
    %4 = vector.broadcast %3 : vector<1x256xf32> to vector<8x256xf32>
    %5 = arith.addf %2, %4 : vector<8x256xf32>
    %c0_5 = arith.constant 0 : index
    %c0_6 = arith.constant 0 : index
    %6 = vector.load %arg5[%c0_5, %c0_6] : memref<8x256xf32, #tpu.memory_space<vmem>>, vector<8x256xf32>
    tpu.vector_store %arg5[%c0_5, %c0_6], %5 {strides = array<i32>} : memref<8x256xf32, #tpu.memory_space<vmem>>, vector<8x256xf32>,
    return
  }
  func.func @transform_0(%arg0: i32, %arg1: i32) -> (i32, i32) {
    %c0_i32 = arith.constant 0 : i32
    %c0_i32_0 = arith.constant 0 : i32
    return %arg1, %c0_i32 : i32, i32
  }
  func.func @transform_1(%arg0: i32, %arg1: i32) -> (i32, i32) {
    %c0_i32 = arith.constant 0 : i32
    %c0_i32_0 = arith.constant 0 : i32
    return %arg0, %c0_i32 : i32, i32
  }
  func.func @transform_2(%arg0: i32, %arg1: i32) -> (i32, i32) {
    %c0_i32 = arith.constant 0 : i32
    %c0_i32_0 = arith.constant 0 : i32
    return %c0_i32, %arg0 : i32, i32
  }
  func.func @transform_3(%arg0: i32, %arg1: i32) -> (i32, i32) {
    %c0_i32 = arith.constant 0 : i32
    return %arg1, %arg0 : i32, i32
  }
}

</mosaic_0001>

<llo_original>
// kernel: dist_classifier_forward.1
$region0: #{dist_classifier_forward.1}
  #allocation0 [shape = 'u32[]', space=smem, size = 0x4, offset = 0x4, fixed_abs, tag = 'smem constant byte address 0x4 - core index']
  #allocation1 [shape = 'u32[72,128]{1,0:T(1,128)}', space=vmem, size = 0x9000, scoped, tag = 'internal scratch']
  %s0 = inlined_call_operand.hbm [shape: f32[8,256], index: 0, kind: input, shape index: {}]
  %s1 = inlined_call_operand.hbm [shape: f32[256,256], index: 1, kind: input, shape index: {}]
  %s2 = inlined_call_operand.vmem [shape: f32[1,256], index: 2, kind: input, shape index: {}]
  %s3 = inlined_call_operand.hbm [shape: f32[8,256], index: 3, kind: output, shape index: {}]
  %s4 = sld [smem:[#allocation0]]
  $region30: #{dist_classifier_forward.1} parent=0
    _
  %s6 = ssub.s32 1, %s4
  %s7 = scalar_select 0, %s6, %s4
  $region1: #{dist_classifier_forward.1} parent=0
    #allocation2 [shape = 'u8[8192]{0}', space=vmem, size = 0x2000, scoped, tag = 'input window, operand 0, single buffered']
    #allocation3 [shape = 's32[1]{0}', space=sflag, size = 0x4, scoped, tag = 'scoped memory for dist_classifier_forward.1']
    #allocation4 [shape = 's32[1]{0}', space=sflag, size = 0x4, scoped, tag = 'scoped memory for dist_classifier_forward.1']
    #allocation5 [shape = 'u8[262144]{0}', space=vmem, size = 0x40000, scoped, tag = 'input window, operand 1, single buffered']
    #allocation6 [shape = 's32[1]{0}', space=sflag, size = 0x4, scoped, tag = 'scoped memory for dist_classifier_forward.1']
    #allocation7 [shape = 'u8[8192]{0}', space=vmem, size = 0x2000, scoped, tag = 'output window, operand 0, single buffered']
    %8 = vsyncpa [#allocation3], 0
    %9 = vsyncpa [#allocation6], 0
    %10 = vsyncpa [#allocation4], 0
    // Predicated region
    $region2: #{dist_classifier_forward.1} parent=1 // pred_check
      _
    $region3: #{dist_classifier_forward.1} parent=1 // pred_check_branch
      %12 = sbr.rel (0) target = $region5
    $region4: #{dist_classifier_forward.1} parent=1 // pred_region
      %14 = vsyncadd [#allocation3], 0
      %s16 = sshll.u32 %s0, 4
      %s17 = int_to_ptr.hbm [resolvable:$true] %s16
      %s18 = sshll.u32 [#allocation2], 4
      %s19 = int_to_ptr.vmem [resolvable:$true] %s18
      %21 = dma.hbm_to_vmem [thread:$0]  %s17, 256, %s19, [#allocation3]
    $region5: #{dist_classifier_forward.1} parent=1 // pred_fallthru
      _
    // Predicated region
    $region6: #{dist_classifier_forward.1} parent=1 // pred_check
      _
    $region7: #{dist_classifier_forward.1} parent=1 // pred_check_branch
      %23 = sbr.rel (0) target = $region9
    $region8: #{dist_classifier_forward.1} parent=1 // pred_region
      %25 = vsyncadd [#allocation6], 0
      %s26 = sshll.u32 %s1, 4
      %s27 = int_to_ptr.hbm [resolvable:$true] %s26
      %s28 = sshll.u32 [#allocation5], 4
      %s29 = int_to_ptr.vmem [resolvable:$true] %s28
      %34 = dma.hbm_to_vmem [thread:$0]  %s27, 8192, %s29, [#allocation6], 256, 256, 16
    $region9: #{dist_classifier_forward.1} parent=1 // pred_fallthru
      _
    // Predicated region
    $region10: #{dist_classifier_forward.1} parent=1 // pred_check
      _
    $region11: #{dist_classifier_forward.1} parent=1 // pred_check_branch
      %36 = sbr.rel (0) target = $region13
    $region12: #{dist_classifier_forward.1} parent=1 // pred_region
      _
    $region13: #{dist_classifier_forward.1} parent=1 // pred_fallthru
      _
    // Predicated region
    $region14: #{dist_classifier_forward.1} parent=1 // pred_check
      _
    $region15: #{dist_classifier_forward.1} parent=1 // pred_check_branch
      %38 = sbr.rel (0) target = $region17
    $region16: #{dist_classifier_forward.1} parent=1 // pred_region
      %40 = dma.done [#allocation3], 256
    $region17: #{dist_classifier_forward.1} parent=1 // pred_fallthru
      _
    // Predicated region
    $region18: #{dist_classifier_forward.1} parent=1 // pred_check
      _
    $region19: #{dist_classifier_forward.1} parent=1 // pred_check_branch
      %42 = sbr.rel (0) target = $region21
    $region20: #{dist_classifier_forward.1} parent=1 // pred_region
      %44 = dma.done [#allocation6], 8192
    $region21: #{dist_classifier_forward.1} parent=1 // pred_fallthru
      _
    %v45 = vld [vmem:[#allocation2] sm:$0xff]
    %v46 = vld [vmem:[#allocation2 + $0x8] sm:$0xff]
    %v47 = vld [vmem:[#allocation5] sm:$0xff]
    %v48 = vld [vmem:[#allocation5 + $0x8] sm:$0xff]
    %v49 = vld [vmem:[#allocation5 + $0x10] sm:$0xff]
    %v50 = vld [vmem:[#allocation5 + $0x18] sm:$0xff]
    %v51 = vld [vmem:[#allocation5 + $0x20] sm:$0xff]
    %v52 = vld [vmem:[#allocation5 + $0x28] sm:$0xff]
    %v53 = vld [vmem:[#allocation5 + $0x30] sm:$0xff]
    %v54 = vld [vmem:[#allocation5 + $0x38] sm:$0xff]
    %v55 = vld [vmem:[#allocation5 + $0x40] sm:$0xff]
    %v56 = vld [vmem:[#allocation5 + $0x48] sm:$0xff]
    %v57 = vld [vmem:[#allocation5 + $0x50] sm:$0xff]
    %v58 = vld [vmem:[#allocation5 + $0x58] sm:$0xff]
    %v59 = vld [vmem:[#allocation5 + $0x60] sm:$0xff]
    %v60 = vld [vmem:[#allocation5 + $0x68] sm:$0xff]
    %v61 = vld [vmem:[#allocation5 + $0x70] sm:$0xff]
    %v62 = vld [vmem:[#allocation5 + $0x78] sm:$0xff]
    %v63 = vld [vmem:[#allocation5 + $0x80] sm:$0xff]
    %v64 = vld [vmem:[#allocation5 + $0x88] sm:$0xff]
    %v65 = vld [vmem:[#allocation5 + $0x90] sm:$0xff]
    %v66 = vld [vmem:[#allocation5 + $0x98] sm:$0xff]
    %v67 = vld [vmem:[#allocation5 + $0xa0] sm:$0xff]
    %v68 = vld [vmem:[#allocation5 + $0xa8] sm:$0xff]
    %v69 = vld [vmem:[#allocation5 + $0xb0] sm:$0xff]
    %v70 = vld [vmem:[#allocation5 + $0xb8] sm:$0xff]
    %v71 = vld [vmem:[#allocation5 + $0xc0] sm:$0xff]
    %v72 = vld [vmem:[#allocation5 + $0xc8] sm:$0xff]
    %v73 = vld [vmem:[#allocation5 + $0xd0] sm:$0xff]
    %v74 = vld [vmem:[#allocation5 + $0xd8] sm:$0xff]
    %v75 = vld [vmem:[#allocation5 + $0xe0] sm:$0xff]
    %v76 = vld [vmem:[#allocation5 + $0xe8] sm:$0xff]
    %v77 = vld [vmem:[#allocation5 + $0xf0] sm:$0xff]
    %v78 = vld [vmem:[#allocation5 + $0xf8] sm:$0xff]
    %v79 = vld [vmem:[#allocation5 + $0x100] sm:$0xff]
    %v80 = vld [vmem:[#allocation5 + $0x108] sm:$0xff]
    %v81 = vld [vmem:[#allocation5 + $0x110] sm:$0xff]
    %v82 = vld [vmem:[#allocation5 + $0x118] sm:$0xff]
    %v83 = vld [vmem:[#allocation5 + $0x120] sm:$0xff]
    %v84 = vld [vmem:[#allocation5 + $0x128] sm:$0xff]
    %v85 = vld [vmem:[#allocation5 + $0x130] sm:$0xff]
    %v86 = vld [vmem:[#allocation5 + $0x138] sm:$0xff]
    %v87 = vld [vmem:[#allocation5 + $0x140] sm:$0xff]
    %v88 = vld [vmem:[#allocation5 + $0x148] sm:$0xff]
    %v89 = vld [vmem:[#allocation5 + $0x150] sm:$0xff]
    %v90 = vld [vmem:[#allocation5 + $0x158] sm:$0xff]
    %v91 = vld [vmem:[#allocation5 + $0x160] sm:$0xff]
    %v92 = vld [vmem:[#allocation5 + $0x168] sm:$0xff]
    %v93 = vld [vmem:[#allocation5 + $0x170] sm:$0xff]
    %v94 = vld [vmem:[#allocation5 + $0x178] sm:$0xff]
    %v95 = vld [vmem:[#allocation5 + $0x180] sm:$0xff]
    %v96 = vld [vmem:[#allocation5 + $0x188] sm:$0xff]
    %v97 = vld [vmem:[#allocation5 + $0x190] sm:$0xff]
    %v98 = vld [vmem:[#allocation5 + $0x198] sm:$0xff]
    %v99 = vld [vmem:[#allocation5 + $0x1a0] sm:$0xff]
    %v100 = vld [vmem:[#allocation5 + $0x1a8] sm:$0xff]
    %v101 = vld [vmem:[#allocation5 + $0x1b0] sm:$0xff]
    %v102 = vld [vmem:[#allocation5 + $0x1b8] sm:$0xff]
    %v103 = vld [vmem:[#allocation5 + $0x1c0] sm:$0xff]
    %v104 = vld [vmem:[#allocation5 + $0x1c8] sm:$0xff]
    %v105 = vld [vmem:[#allocation5 + $0x1d0] sm:$0xff]
    %v106 = vld [vmem:[#allocation5 + $0x1d8] sm:$0xff]
    %v107 = vld [vmem:[#allocation5 + $0x1e0] sm:$0xff]
    %v108 = vld [vmem:[#allocation5 + $0x1e8] sm:$0xff]
    %v109 = vld [vmem:[#allocation5 + $0x1f0] sm:$0xff]
    %v110 = vld [vmem:[#allocation5 + $0x1f8] sm:$0xff]
    %v111 = vld [vmem:[%s2] sm:$0x3]
    %v113 = vperm.slane %v111, 0
    %v114 = vperm.slane %v111, 1
    %117 = vmatpush.xpose.msra.mxu0 %v77
    %118 = vmatpush.xpose.msra.mxu0 %v75
    %119 = vmatpush.xpose.msra.mxu0 %v73
    %120 = vmatpush.xpose.msra.mxu0 %v71
    %121 = vmatpush.xpose.msra.mxu0 %v69
    %122 = vmatpush.xpose.msra.mxu0 %v67
    %123 = vmatpush.xpose.msra.mxu0 %v65
    %124 = vmatpush.xpose.msra.mxu0 %v63
    %125 = vmatpush.xpose.msra.mxu0 %v61
    %126 = vmatpush.xpose.msra.mxu0 %v59
    %127 = vmatpush.xpose.msra.mxu0 %v57
    %128 = vmatpush.xpose.msra.mxu0 %v55
    %129 = vmatpush.xpose.msra.mxu0 %v53
    %130 = vmatpush.xpose.msra.mxu0 %v51
    %131 = vmatpush.xpose.msra.mxu0 %v49
    %132 = vmatpush.xpose.msra.mxu0 %v47
    %133 = vmatmul.f32.gmra.mxu0 %v45
    %v134 = vpop.f32.mrf.mxu0
    %v135 = vadd.f32 %v113, %v134
    %136 = vdwg.mxu0
    %137 = vmatpush.xpose.msra.mxu0 %v78
    %138 = vmatpush.xpose.msra.mxu0 %v76
    %139 = vmatpush.xpose.msra.mxu0 %v74
    %140 = vmatpush.xpose.msra.mxu0 %v72
    %141 = vmatpush.xpose.msra.mxu0 %v70
    %142 = vmatpush.xpose.msra.mxu0 %v68
    %143 = vmatpush.xpose.msra.mxu0 %v66
    %144 = vmatpush.xpose.msra.mxu0 %v64
    %145 = vmatpush.xpose.msra.mxu0 %v62
    %146 = vmatpush.xpose.msra.mxu0 %v60
    %147 = vmatpush.xpose.msra.mxu0 %v58
    %148 = vmatpush.xpose.msra.mxu0 %v56
    %149 = vmatpush.xpose.msra.mxu0 %v54
    %150 = vmatpush.xpose.msra.mxu0 %v52
    %151 = vmatpush.xpose.msra.mxu0 %v50
    %152 = vmatpush.xpose.msra.mxu0 %v48
    %153 = vmatmul.f32.gmra.mxu0 %v46
    %v154 = vpop.f32.mrf.mxu0
    %v155 = vadd.f32 %v135, %v154
    %156 = vdwg.mxu0
    %157 = vmatpush.xpose.msra.mxu0 %v109
    %158 = vmatpush.xpose.msra.mxu0 %v107
    %159 = vmatpush.xpose.msra.mxu0 %v105
    %160 = vmatpush.xpose.msra.mxu0 %v103
    %161 = vmatpush.xpose.msra.mxu0 %v101
    %162 = vmatpush.xpose.msra.mxu0 %v99
    %163 = vmatpush.xpose.msra.mxu0 %v97
    %164 = vmatpush.xpose.msra.mxu0 %v95
    %165 = vmatpush.xpose.msra.mxu0 %v93
    %166 = vmatpush.xpose.msra.mxu0 %v91
    %167 = vmatpush.xpose.msra.mxu0 %v89
    %168 = vmatpush.xpose.msra.mxu0 %v87
    %169 = vmatpush.xpose.msra.mxu0 %v85
    %170 = vmatpush.xpose.msra.mxu0 %v83
    %171 = vmatpush.xpose.msra.mxu0 %v81
    %172 = vmatpush.xpose.msra.mxu0 %v79
    %173 = vmatmul.f32.gmra.mxu0 %v45
    %v174 = vpop.f32.mrf.mxu0
    %v175 = vadd.f32 %v114, %v174
    %176 = vdwg.mxu0
    %177 = vmatpush.xpose.msra.mxu0 %v110
    %178 = vmatpush.xpose.msra.mxu0 %v108
    %179 = vmatpush.xpose.msra.mxu0 %v106
    %180 = vmatpush.xpose.msra.mxu0 %v104
    %181 = vmatpush.xpose.msra.mxu0 %v102
    %182 = vmatpush.xpose.msra.mxu0 %v100
    %183 = vmatpush.xpose.msra.mxu0 %v98
    %184 = vmatpush.xpose.msra.mxu0 %v96
    %185 = vmatpush.xpose.msra.mxu0 %v94
    %186 = vmatpush.xpose.msra.mxu0 %v92
    %187 = vmatpush.xpose.msra.mxu0 %v90
    %188 = vmatpush.xpose.msra.mxu0 %v88
    %189 = vmatpush.xpose.msra.mxu0 %v86
    %190 = vmatpush.xpose.msra.mxu0 %v84
    %191 = vmatpush.xpose.msra.mxu0 %v82
    %192 = vmatpush.xpose.msra.mxu0 %v80
    %193 = vmatmul.f32.gmra.mxu0 %v46
    %v194 = vpop.f32.mrf.mxu0
    %v195 = vadd.f32 %v175, %v194
    %196 = vdwg.mxu0
    %197 = vst [vmem:[#allocation7] sm:$0xff] %v155
    %198 = vst [vmem:[#allocation7 + $0x8] sm:$0xff] %v195
    // Predicated region
    $region22: #{dist_classifier_forward.1} parent=1 // pred_check
      _
    $region23: #{dist_classifier_forward.1} parent=1 // pred_check_branch
      %200 = sbr.rel (0) target = $region25
    $region24: #{dist_classifier_forward.1} parent=1 // pred_region
      %202 = vsyncadd [#allocation4], 0
      %s204 = sshll.u32 [#allocation7], 4
      %s205 = int_to_ptr.vmem [resolvable:$true] %s204
      %s206 = sshll.u32 %s3, 4
      %s207 = int_to_ptr.hbm [resolvable:$true] %s206
      %209 = dma.vmem_to_hbm [thread:$0]  %s205, 256, %s207, [#allocation4]
    $region25: #{dist_classifier_forward.1} parent=1 // pred_fallthru
      _
    // Predicated region
    $region26: #{dist_classifier_forward.1} parent=1 // pred_check
      _
    $region27: #{dist_classifier_forward.1} parent=1 // pred_check_branch
      %211 = sbr.rel (0) target = $region29
    $region28: #{dist_classifier_forward.1} parent=1 // pred_region
      %213 = dma.done [#allocation4], 256
    $region29: #{dist_classifier_forward.1} parent=1 // pred_fallthru
      _
    %214 = vsyncpa [#allocation3], 1
    %215 = vsyncpa [#allocation6], 1
    %216 = vsyncpa [#allocation4], 1

</llo_original>
